<compile_context>
chip_gen: v6e
topology: v6e:2x2x1
jax: 0.10.0
libtpu: 0.0.40
codegen_flags: <defaults>
</compile_context>

<pallas_src>
import jax
import jax.numpy as jnp
from jax import lax
from jax.experimental import pallas as pl
from jax.experimental.pallas import tpu as pltpu


def value_net_kernel(x_ref, w1_ref, b1_ref, w2_ref, b2_ref, out_ref):
    # fc1 on the MXU (f32 accumulation); bias + ReLU in f32 on the VPU.
    h = jnp.dot(x_ref[...], w1_ref[...], preferred_element_type=jnp.float32)
    h = jnp.maximum(h + b1_ref[...], 0.0)
    # fc2: contract the hidden dim of w2_row (1, H) against h (TILE_B, H)
    # -> (1, TILE_B).  The result is lane-dense (batch along lanes), so the
    # store is a full-width vst except on the ragged final tile.
    v = lax.dot_general(
        w2_ref[...], h,
        dimension_numbers=(((1,), (1,)), ((), ())),
        preferred_element_type=jnp.float32,
    )
    out_ref[...] = (v + b2_ref[0]).astype(out_ref.dtype)


def _choose_tile_b(B, S, H, x_itemsize, requested=None):
    """Pick a batch tile (multiple of 128, or B if B < 128) and its VMEM footprint."""

    def footprint(tb):
        return (3 * tb * S * x_itemsize        # x stream (up to Buffered(3))
                + (S * H + 2 * H) * 4          # w1 + b1 + w2_row (Buffered(1))
                + tb * H * 4                   # h temporary (f32)
                + 2 * 2 * tb * 4)              # (1, tile_b) f32 out, double-buffered

    if B < 128:
        # Single block whose dims equal the full array dims (always legal).
        return B, footprint(B)

    b_floor = (B // 128) * 128
    if requested is not None:
        tile_b = max(128, (int(requested) // 128) * 128)
    else:
        # Target ~2 MiB of streamed x per grid step to amortize the ~0.35 us
        # fixed per-step overhead.
        target_x_bytes = 2 << 20
        tile_b = max(128, (target_x_bytes // (x_itemsize * S)) // 128 * 128)

    if B >= 256:
        # Keep >= 2 comparable grid steps so dimension_semantics=("parallel",)
        # can shard the batch across both v7x TensorCores.
        half = ((pl.cdiv(B, 2) + 127) // 128) * 128
        tile_b = min(tile_b, half)
    tile_b = min(tile_b, b_floor)

    # Conservative VMEM budget, legal on every generation (v5e 16 MiB default
    # scoped limit, v7x 64 MiB physical).
    # TODO(synk): if S*H*4 alone approaches the budget, add a K-tiling grid axis
    # over S ("arbitrary") with a pl.when-guarded f32 accumulator instead of
    # only shrinking tile_b.
    budget = 12 << 20
    while tile_b > 128 and footprint(tile_b) > budget:
        tile_b -= 128
    return tile_b, footprint(tile_b)


def value_net_forward(x, w1, b1, w2, b2, *, tile_b=None, use_bf16_matmul=False):
    """Fused ValueNet forward: relu(x @ w1 + b1) @ w2 + b2 -> (B, 1)."""
    B, S = x.shape
    H = w1.shape[1]

    x = x.astype(jnp.float32)
    w1 = w1.astype(jnp.float32)
    b1_row = b1.reshape(1, H).astype(jnp.float32)     # (1, H) bias row
    w2_row = w2.reshape(1, H).astype(jnp.float32)     # (1, H) weight row
    b2_s = b2.reshape(1).astype(jnp.float32)          # 1-D SMEM scalar

    if use_bf16_matmul:
        # bf16 MXU inputs, f32 accumulation (legal on v5e: only the matmul is
        # bf16; the VPU bias/ReLU path stays f32).  Perturbs numerics slightly.
        x = x.astype(jnp.bfloat16)
        w1 = w1.astype(jnp.bfloat16)

    tb, vmem_footprint = _choose_tile_b(B, S, H, x.dtype.itemsize, tile_b)
    n_tiles = pl.cdiv(B, tb)

    # Triple-buffer the x stream only when there are enough grid steps; the
    # weight operands are single-buffered (constant index_map -> fetched once).
    x_pipeline = pl.Buffered(3) if n_tiles >= 3 else None
    resident = pl.Buffered(1)

    flops = 2 * B * (S * H + H)
    bytes_accessed = 4 * (B * S + S * H + 2 * H + 1 + B)
    vmem_limit = int(min(max(vmem_footprint + (4 << 20), 32 << 20), 48 << 20))

    out = pl.pallas_call(
        value_net_kernel,
        out_shape=jax.ShapeDtypeStruct((1, B), jnp.float32),
        grid=(n_tiles,),
        in_specs=[
            pl.BlockSpec((tb, S), lambda i: (i, 0),
                         pipeline_mode=x_pipeline),                  # x: streamed
            pl.BlockSpec((S, H), lambda i: (0, 0),
                         pipeline_mode=resident),                    # w1: resident
            pl.BlockSpec((1, H), lambda i: (0, 0),
                         pipeline_mode=resident),                    # b1: resident
            pl.BlockSpec((1, H), lambda i: (0, 0),
                         pipeline_mode=resident),                    # w2 row: resident
            pl.BlockSpec(memory_space=pltpu.MemorySpace.SMEM),       # b2: SMEM scalar
        ],
        out_specs=pl.BlockSpec((1, tb), lambda i: (0, i)),           # lane-dense values
        compiler_params=pltpu.CompilerParams(
            dimension_semantics=("parallel",),
            vmem_limit_bytes=vmem_limit,
        ),
        cost_estimate=pl.CostEstimate(
            flops=flops, transcendentals=0, bytes_accessed=bytes_accessed),
    )(x, w1, b1_row, w2_row, b2_s)

    # (1, B) lane-dense values -> (B, 1) column, matching nn.Linear(H, 1) output.
    return out.reshape(B, 1)


def init_params(key, state_dim, hidden_dim):
    # Deterministic init mimicking torch.nn.Linear (uniform +/- 1/sqrt(fan_in)).
    k1, k2, k3, k4 = jax.random.split(key, 4)
    lim1 = 1.0 / jnp.sqrt(jnp.float32(state_dim))
    lim2 = 1.0 / jnp.sqrt(jnp.float32(hidden_dim))
    w1 = jax.random.uniform(k1, (state_dim, hidden_dim), jnp.float32, -lim1, lim1)
    b1 = jax.random.uniform(k2, (hidden_dim,), jnp.float32, -lim1, lim1)
    w2 = jax.random.uniform(k3, (hidden_dim, 1), jnp.float32, -lim2, lim2)
    b2 = jax.random.uniform(k4, (1,), jnp.float32, -lim2, lim2)
    return w1, b1, w2, b2


if __name__ == "__main__":
    batch, state_dim, hidden_dim = 8, 16, 32

    key = jax.random.PRNGKey(0)
    kx, kp = jax.random.split(key)
    x = jax.random.normal(kx, (batch, state_dim), jnp.float32)
    w1, b1, w2, b2 = init_params(kp, state_dim, hidden_dim)

    out = value_net_forward(x, w1, b1, w2, b2)
    jax.block_until_ready(out)

    # Pure-JAX reference check of the fused kernel (small-batch, single tile).
    ref = jnp.maximum(x @ w1 + b1.reshape(1, -1), 0.0) @ w2 + b2.reshape(1, 1)
    assert out.shape == (batch, 1)
    assert jnp.allclose(out, ref, atol=1e-5, rtol=1e-5)

    # Also exercise the no-padding ragged/multi-tile path (B not a multiple of
    # the tile): tail rows are garbage in-kernel but masked on store.
    batch2 = 300
    x2 = jax.random.normal(jax.random.PRNGKey(1), (batch2, state_dim), jnp.float32)
    out2 = value_net_forward(x2, w1, b1, w2, b2)
    jax.block_until_ready(out2)
    ref2 = jnp.maximum(x2 @ w1 + b1.reshape(1, -1), 0.0) @ w2 + b2.reshape(1, 1)
    assert out2.shape == (batch2, 1)
    assert jnp.allclose(out2, ref2, atol=1e-5, rtol=1e-5)

    print("KERNEL_OK")
</pallas_src>

<mosaic_0001>
module attributes {stable_mosaic.version = 11 : i64} {
  func.func @value_net_kernel(%arg0: i32, %arg1: memref<8x16xf32, #tpu.memory_space<vmem>>, %arg2: memref<16x32xf32, #tpu.memory_space<vmem>>, %arg3: memref<1x32xf32, #tpu.memory_space<vmem>>, %arg4: memref<1x32xf32, #tpu.memory_space<vmem>>, %arg5: memref<1xf32, #tpu.memory_space<smem>>, %arg6: memref<1x8xf32, #tpu.memory_space<vmem>>) attributes {dimension_semantics = [#tpu.dimension_semantics<parallel>], iteration_bounds = array<i64: 1>, scalar_prefetch = 0 : i64, scratch_operands = 0 : i64, tpu.core_type = #tpu.core_type<tc>, window_params = [{transform_indices = @transform_0, window_bounds = array<i64: 8, 16>}, {pipeline_mode = #tpu.pipeline_mode<synchronous>, transform_indices = @transform_1, window_bounds = array<i64: 16, 32>}, {pipeline_mode = #tpu.pipeline_mode<synchronous>, transform_indices = @transform_2, window_bounds = array<i64: 1, 32>}, {pipeline_mode = #tpu.pipeline_mode<synchronous>, transform_indices = @transform_3, window_bounds = array<i64: 1, 32>}, {transform_indices = @transform_4, window_bounds = array<i64: 1>}, {transform_indices = @transform_5, window_bounds = array<i64: 1, 8>}]} {
    %c0 = arith.constant 0 : index
    %c0_0 = arith.constant 0 : index
    %0 = vector.load %arg1[%c0, %c0_0] : memref<8x16xf32, #tpu.memory_space<vmem>>, vector<8x16xf32>
    %c0_1 = arith.constant 0 : index
    %c0_2 = arith.constant 0 : index
    %1 = vector.load %arg2[%c0_1, %c0_2] : memref<16x32xf32, #tpu.memory_space<vmem>>, vector<16x32xf32>
    %cst = arith.constant dense<0.000000e+00> : vector<8x32xf32>
    %2 = tpu.matmul %0, %1, %cst {dimension_numbers = #tpu.dot_dimension_numbers<[1], [0], [0], [1], [0, 0, 1, 1], [], []>} : vector<8x16xf32>, vector<16x32xf32>, vector<8x32xf32> -> vector<8x32xf32>
    %c0_3 = arith.constant 0 : index
    %c0_4 = arith.constant 0 : index
    %3 = vector.load %arg3[%c0_3, %c0_4] : memref<1x32xf32, #tpu.memory_space<vmem>>, vector<1x32xf32>
    %4 = vector.broadcast %3 : vector<1x32xf32> to vector<8x32xf32>
    %5 = arith.addf %2, %4 : vector<8x32xf32>
    %cst_5 = arith.constant 0.000000e+00 : f32
    %6 = vector.broadcast %cst_5 : f32 to vector<8x32xf32>
    %7 = arith.maximumf %5, %6 : vector<8x32xf32>
    %c0_6 = arith.constant 0 : index
    %c0_7 = arith.constant 0 : index
    %8 = vector.load %arg4[%c0_6, %c0_7] : memref<1x32xf32, #tpu.memory_space<vmem>>, vector<1x32xf32>
    %cst_8 = arith.constant dense<0.000000e+00> : vector<1x8xf32>
    %9 = tpu.matmul %8, %7, %cst_8 {dimension_numbers = #tpu.dot_dimension_numbers<[1], [1], [0], [0], [0, 0, 1, 0], [], []>} : vector<1x32xf32>, vector<8x32xf32>, vector<1x8xf32> -> vector<1x8xf32>
    %c0_9 = arith.constant 0 : index
    %10 = memref.load %arg5[%c0_9] : memref<1xf32, #tpu.memory_space<smem>>
    %11 = vector.broadcast %10 : f32 to vector<1x8xf32>
    %12 = arith.addf %9, %11 : vector<1x8xf32>
    %c0_10 = arith.constant 0 : index
    %c0_11 = arith.constant 0 : index
    %13 = vector.load %arg6[%c0_10, %c0_11] : memref<1x8xf32, #tpu.memory_space<vmem>>, vector<1x8xf32>
    tpu.vector_store %arg6[%c0_10, %c0_11], %12 {strides = array<i32>} : memref<1x8xf32, #tpu.memory_space<vmem>>, vector<1x8xf32>,
    return
  }
  func.func @transform_0(%arg0: i32) -> (i32, i32) {
    %c0_i32 = arith.constant 0 : i32
    %c0_i32_0 = arith.constant 0 : i32
    return %arg0, %c0_i32 : i32, i32
  }
  func.func @transform_1(%arg0: i32) -> (i32, i32) {
    %c0_i32 = arith.constant 0 : i32
    %c0_i32_0 = arith.constant 0 : i32
    %c0_i32_1 = arith.constant 0 : i32
    return %c0_i32, %c0_i32_0 : i32, i32
  }
  func.func @transform_2(%arg0: i32) -> (i32, i32) {
    %c0_i32 = arith.constant 0 : i32
    %c0_i32_0 = arith.constant 0 : i32
    %c0_i32_1 = arith.constant 0 : i32
    return %c0_i32, %c0_i32_0 : i32, i32
  }
  func.func @transform_3(%arg0: i32) -> (i32, i32) {
    %c0_i32 = arith.constant 0 : i32
    %c0_i32_0 = arith.constant 0 : i32
    %c0_i32_1 = arith.constant 0 : i32
    return %c0_i32, %c0_i32_0 : i32, i32
  }
  func.func @transform_4(%arg0: i32) -> i32 {
    %c0_i32 = arith.constant 0 : i32
    %c0_i32_0 = arith.constant 0 : i32
    return %c0_i32 : i32
  }
  func.func @transform_5(%arg0: i32) -> (i32, i32) {
    %c0_i32 = arith.constant 0 : i32
    %c0_i32_0 = arith.constant 0 : i32
    return %c0_i32, %arg0 : i32, i32
  }
}

</mosaic_0001>

<llo_original>
// kernel: tpu_custom_call.1
$region0: #{tpu_custom_call.1}
  #allocation0 [shape = 'u32[]', space=smem, size = 0x4, offset = 0x4, fixed_abs, tag = 'smem constant byte address 0x4 - core index']
  #allocation1 [shape = 'u32[144,128]{1,0:T(1,128)}', space=vmem, size = 0x12000, scoped, tag = 'internal scratch']
  #allocation2 [shape = 'f32[1]{0:T(128)S(6)}', space=smem, size = 0x200, scoped, tag = 'scoped memory for tpu_custom_call.1']
  %s0 = inlined_call_operand.hbm [shape: f32[8,16], index: 0, kind: input, shape index: {}]
  %s1 = inlined_call_operand.hbm [shape: f32[16,32], index: 1, kind: input, shape index: {}]
  %s2 = inlined_call_operand.vmem [shape: f32[1,32], index: 2, kind: input, shape index: {}]
  %s3 = inlined_call_operand.vmem [shape: f32[1,32], index: 3, kind: input, shape index: {}]
  %s4 = inlined_call_operand.<no memory space> [shape: f32[1], index: 4, kind: input, shape index: {}]
  %s5 = inlined_call_operand.hbm [shape: f32[1,8], index: 5, kind: output, shape index: {}]
  %s6 = sld [smem:[#allocation0]]
  $region38: #{tpu_custom_call.1} parent=0
    _
  %s8 = ssub.s32 1, %s6
  %s9 = scalar_select 0, %s8, %s6
  %10 = sst [smem:[#allocation2]] %s4
  $region1: #{tpu_custom_call.1} parent=0
    #allocation3 [shape = 'u8[4096]{0}', space=vmem, size = 0x1000, scoped, tag = 'input window, operand 0, single buffered']
    #allocation4 [shape = 's32[1]{0}', space=sflag, size = 0x4, scoped, tag = 'scoped memory for tpu_custom_call.1']
    #allocation5 [shape = 's32[1]{0}', space=sflag, size = 0x4, scoped, tag = 'scoped memory for tpu_custom_call.1']
    #allocation6 [shape = 'u8[8192]{0}', space=vmem, size = 0x2000, scoped, tag = 'input window, operand 1, single buffered']
    #allocation7 [shape = 's32[1]{0}', space=sflag, size = 0x4, scoped, tag = 'scoped memory for tpu_custom_call.1']
    #allocation8 [shape = 'u8[512]{0}', space=vmem, size = 0x400, scoped, tag = 'output window, operand 0, single buffered']
    %11 = vsyncpa [#allocation4], 0
    %12 = vsyncpa [#allocation7], 0
    %13 = vsyncpa [#allocation5], 0
    // Predicated region
    $region2: #{tpu_custom_call.1} parent=1 // pred_check
      _
    $region3: #{tpu_custom_call.1} parent=1 // pred_check_branch
      %15 = sbr.rel (0) target = $region5
    $region4: #{tpu_custom_call.1} parent=1 // pred_region
      %s17 = ssub.s32 128, 128
      %18 = vsyncadd [#allocation4], %s17
      %s20 = sshll.u32 [#allocation3], 4
      %s21 = int_to_ptr.vmem [resolvable:$true] %s20
      %23 = dma.hbm_to_vmem [thread:$0]  %s0, 128, %s21, [#allocation4]
    $region5: #{tpu_custom_call.1} parent=1 // pred_fallthru
      _
    // Predicated region
    $region6: #{tpu_custom_call.1} parent=1 // pred_check
      _
    $region7: #{tpu_custom_call.1} parent=1 // pred_check_branch
      %25 = sbr.rel (0) target = $region9
    $region8: #{tpu_custom_call.1} parent=1 // pred_region
      %s27 = ssub.s32 256, 256
      %28 = vsyncadd [#allocation7], %s27
      %s29 = sshll.u32 [#allocation6], 4
      %s30 = int_to_ptr.vmem [resolvable:$true] %s29
      %35 = dma.hbm_to_vmem [thread:$0]  %s1, 256, %s30, [#allocation7], 128, 128, 8
    $region9: #{tpu_custom_call.1} parent=1 // pred_fallthru
      _
    // Predicated region
    $region10: #{tpu_custom_call.1} parent=1 // pred_check
      _
    $region11: #{tpu_custom_call.1} parent=1 // pred_check_branch
      %37 = sbr.rel (0) target = $region13
    $region12: #{tpu_custom_call.1} parent=1 // pred_region
      _
    $region13: #{tpu_custom_call.1} parent=1 // pred_fallthru
      _
    // Predicated region
    $region14: #{tpu_custom_call.1} parent=1 // pred_check
      _
    $region15: #{tpu_custom_call.1} parent=1 // pred_check_branch
      %39 = sbr.rel (0) target = $region17
    $region16: #{tpu_custom_call.1} parent=1 // pred_region
      _
    $region17: #{tpu_custom_call.1} parent=1 // pred_fallthru
      _
    // Predicated region
    $region18: #{tpu_custom_call.1} parent=1 // pred_check
      _
    $region19: #{tpu_custom_call.1} parent=1 // pred_check_branch
      %41 = sbr.rel (0) target = $region21
    $region20: #{tpu_custom_call.1} parent=1 // pred_region
      _
    $region21: #{tpu_custom_call.1} parent=1 // pred_fallthru
      _
    // Predicated region
    $region22: #{tpu_custom_call.1} parent=1 // pred_check
      _
    $region23: #{tpu_custom_call.1} parent=1 // pred_check_branch
      %43 = sbr.rel (0) target = $region25
    $region24: #{tpu_custom_call.1} parent=1 // pred_region
      %44 = dma.done [#allocation4], 128
    $region25: #{tpu_custom_call.1} parent=1 // pred_fallthru
      _
    // Predicated region
    $region26: #{tpu_custom_call.1} parent=1 // pred_check
      _
    $region27: #{tpu_custom_call.1} parent=1 // pred_check_branch
      %46 = sbr.rel (0) target = $region29
    $region28: #{tpu_custom_call.1} parent=1 // pred_region
      %47 = dma.done [#allocation7], 256
    $region29: #{tpu_custom_call.1} parent=1 // pred_fallthru
      _
    %v48 = vld [vmem:[#allocation3] sm:$0xff]
    %v49 = vld [vmem:[#allocation6] sm:$0xff]
    %v50 = vld [vmem:[#allocation6 + $0x8] sm:$0xff]
    %v51 = vld [vmem:[%s2] sm:$0x1]
    %v53 = vlaneseq
    %v54 = vshrl.u32 %v53, 7
    %v55 = vsub.s32 0, %v54
    %v56 = vrot.slane %v51, %v55
    %vm58 = vcmask 130048
    %v60 = vsel %vm58, %v48, 0
    %62 = vmatprep.subr.mxu0 0.0
    %63 = vmatpush1.msra.mxu0 0.0
    %64 = vmatprep.subr.mxu0 0.0
    %65 = vmatpush1.msra.mxu0 0.0
    %66 = vmatprep.subr.mxu0 0.0
    %67 = vmatpush1.msra.mxu0 0.0
    %68 = vmatprep.subr.mxu0 0.0
    %69 = vmatpush1.msra.mxu0 0.0
    %70 = vmatprep.subr.mxu0 0.0
    %71 = vmatpush1.msra.mxu0 0.0
    %72 = vmatprep.subr.mxu0 0.0
    %73 = vmatpush1.msra.mxu0 0.0
    %74 = vmatprep.subr.mxu0 0.0
    %75 = vmatpush1.msra.mxu0 0.0
    %76 = vmatprep.subr.mxu0 0.0
    %77 = vmatpush1.msra.mxu0 0.0
    %78 = vmatprep.subr.mxu0 0.0
    %79 = vmatpush1.msra.mxu0 0.0
    %80 = vmatprep.subr.mxu0 0.0
    %81 = vmatpush1.msra.mxu0 0.0
    %82 = vmatprep.subr.mxu0 0.0
    %83 = vmatpush1.msra.mxu0 0.0
    %84 = vmatprep.subr.mxu0 0.0
    %85 = vmatpush1.msra.mxu0 0.0
    %86 = vmatprep.subr.mxu0 0.0
    %87 = vmatpush1.msra.mxu0 0.0
    %88 = vmatprep.subr.mxu0 0.0
    %89 = vmatpush1.msra.mxu0 0.0
    %90 = vmatprep.subr.mxu0 0.0
    %91 = vmatpush1.msra.mxu0 %v50
    %92 = vmatprep.subr.mxu0 0.0
    %93 = vmatpush1.msra.mxu0 %v49
    %94 = vmatprep.subr.mxu0 0.0
    %95 = vmatpush2.msra.mxu0 0.0
    %96 = vmatprep.subr.mxu0 0.0
    %97 = vmatpush2.msra.mxu0 0.0
    %98 = vmatprep.subr.mxu0 0.0
    %99 = vmatpush2.msra.mxu0 0.0
    %100 = vmatprep.subr.mxu0 0.0
    %101 = vmatpush2.msra.mxu0 0.0
    %102 = vmatprep.subr.mxu0 0.0
    %103 = vmatpush2.msra.mxu0 0.0
    %104 = vmatprep.subr.mxu0 0.0
    %105 = vmatpush2.msra.mxu0 0.0
    %106 = vmatprep.subr.mxu0 0.0
    %107 = vmatpush2.msra.mxu0 0.0
    %108 = vmatprep.subr.mxu0 0.0
    %109 = vmatpush2.msra.mxu0 0.0
    %110 = vmatprep.subr.mxu0 0.0
    %111 = vmatpush2.msra.mxu0 0.0
    %112 = vmatprep.subr.mxu0 0.0
    %113 = vmatpush2.msra.mxu0 0.0
    %114 = vmatprep.subr.mxu0 0.0
    %115 = vmatpush2.msra.mxu0 0.0
    %116 = vmatprep.subr.mxu0 0.0
    %117 = vmatpush2.msra.mxu0 0.0
    %118 = vmatprep.subr.mxu0 0.0
    %119 = vmatpush2.msra.mxu0 0.0
    %120 = vmatprep.subr.mxu0 0.0
    %121 = vmatpush2.msra.mxu0 0.0
    %122 = vmatprep.subr.mxu0 0.0
    %123 = vmatpush2.msra.mxu0 0.0
    %124 = vmatprep.subr.mxu0 0.0
    %125 = vmatpush2.msra.mxu0 0.0
    %126 = vmatprep.mubr.f32.mxu0 0.0
    %127 = vmatmul.mubr.f32.gmra.mxu0 %v60
    %v128 = vpop.f32.mrf.mxu0
    %v129 = vadd.f32 %v56, %v128
    %v130 = vpop.f32.mrf.mxu0
    %131 = vdwg.mxu0
    %v132 = vmax.f32 %v129, 0.0
    %v133 = vld [vmem:[%s3] sm:$0x1]
    %s134 = sld [smem:[#allocation2]]
    %v135 = vstv %s134
    %vm136 = vcmask 261120
    %v138 = vsel %vm136, %v133, 0
    %v141 = vsel %vm136, %v132, 0
    %143 = vmatprep.subr.mxu0 0.0
    %144 = vmatpush1.xpose.msra.mxu0 0.0
    %145 = vmatprep.subr.mxu0 0.0
    %146 = vmatpush1.xpose.msra.mxu0 0.0
    %147 = vmatprep.subr.mxu0 0.0
    %148 = vmatpush1.xpose.msra.mxu0 0.0
    %149 = vmatprep.subr.mxu0 0.0
    %150 = vmatpush1.xpose.msra.mxu0 0.0
    %151 = vmatprep.subr.mxu0 0.0
    %152 = vmatpush1.xpose.msra.mxu0 0.0
    %153 = vmatprep.subr.mxu0 0.0
    %154 = vmatpush1.xpose.msra.mxu0 0.0
    %155 = vmatprep.subr.mxu0 0.0
    %156 = vmatpush1.xpose.msra.mxu0 0.0
    %157 = vmatprep.subr.mxu0 0.0
    %158 = vmatpush1.xpose.msra.mxu0 0.0
    %159 = vmatprep.subr.mxu0 0.0
    %160 = vmatpush1.xpose.msra.mxu0 0.0
    %161 = vmatprep.subr.mxu0 0.0
    %162 = vmatpush1.xpose.msra.mxu0 0.0
    %163 = vmatprep.subr.mxu0 0.0
    %164 = vmatpush1.xpose.msra.mxu0 0.0
    %165 = vmatprep.subr.mxu0 0.0
    %166 = vmatpush1.xpose.msra.mxu0 0.0
    %167 = vmatprep.subr.mxu0 0.0
    %168 = vmatpush1.xpose.msra.mxu0 0.0
    %169 = vmatprep.subr.mxu0 0.0
    %170 = vmatpush1.xpose.msra.mxu0 0.0
    %171 = vmatprep.subr.mxu0 0.0
    %172 = vmatpush1.xpose.msra.mxu0 0.0
    %173 = vmatprep.subr.mxu0 0.0
    %174 = vmatpush1.xpose.msra.mxu0 %v141
    %175 = vmatprep.subr.mxu0 0.0
    %176 = vmatpush2.xpose.msra.mxu0 0.0
    %177 = vmatprep.subr.mxu0 0.0
    %178 = vmatpush2.xpose.msra.mxu0 0.0
    %179 = vmatprep.subr.mxu0 0.0
    %180 = vmatpush2.xpose.msra.mxu0 0.0
    %181 = vmatprep.subr.mxu0 0.0
    %182 = vmatpush2.xpose.msra.mxu0 0.0
    %183 = vmatprep.subr.mxu0 0.0
    %184 = vmatpush2.xpose.msra.mxu0 0.0
    %185 = vmatprep.subr.mxu0 0.0
    %186 = vmatpush2.xpose.msra.mxu0 0.0
    %187 = vmatprep.subr.mxu0 0.0
    %188 = vmatpush2.xpose.msra.mxu0 0.0
    %189 = vmatprep.subr.mxu0 0.0
    %190 = vmatpush2.xpose.msra.mxu0 0.0
    %191 = vmatprep.subr.mxu0 0.0
    %192 = vmatpush2.xpose.msra.mxu0 0.0
    %193 = vmatprep.subr.mxu0 0.0
    %194 = vmatpush2.xpose.msra.mxu0 0.0
    %195 = vmatprep.subr.mxu0 0.0
    %196 = vmatpush2.xpose.msra.mxu0 0.0
    %197 = vmatprep.subr.mxu0 0.0
    %198 = vmatpush2.xpose.msra.mxu0 0.0
    %199 = vmatprep.subr.mxu0 0.0
    %200 = vmatpush2.xpose.msra.mxu0 0.0
    %201 = vmatprep.subr.mxu0 0.0
    %202 = vmatpush2.xpose.msra.mxu0 0.0
    %203 = vmatprep.subr.mxu0 0.0
    %204 = vmatpush2.xpose.msra.mxu0 0.0
    %205 = vmatprep.subr.mxu0 0.0
    %206 = vmatpush2.xpose.msra.mxu0 0.0
    %207 = vmatprep.mubr.f32.mxu0 0.0
    %208 = vmatmul.mubr.f32.gmra.mxu0 %v138
    %v209 = vpop.f32.mrf.mxu0
    %v210 = vadd.f32 %v135, %v209
    %v211 = vpop.f32.mrf.mxu0
    %212 = vdwg.mxu0
    %vm213 = vcmask 57344
    %214 = vst.msk [vmem:[#allocation8] sm:$0x1] %vm213, %v210
    // Predicated region
    $region30: #{tpu_custom_call.1} parent=1 // pred_check
      _
    $region31: #{tpu_custom_call.1} parent=1 // pred_check_branch
      %216 = sbr.rel (0) target = $region33
    $region32: #{tpu_custom_call.1} parent=1 // pred_region
      %s218 = ssub.s32 16, 16
      %219 = vsyncadd [#allocation5], %s218
      %s221 = sshll.u32 [#allocation8], 4
      %s222 = int_to_ptr.vmem [resolvable:$true] %s221
      %224 = dma.vmem_to_hbm [thread:$0]  %s222, 16, %s5, [#allocation5]
    $region33: #{tpu_custom_call.1} parent=1 // pred_fallthru
      _
    // Predicated region
    $region34: #{tpu_custom_call.1} parent=1 // pred_check
      _
    $region35: #{tpu_custom_call.1} parent=1 // pred_check_branch
      %226 = sbr.rel (0) target = $region37
    $region36: #{tpu_custom_call.1} parent=1 // pred_region
      %227 = dma.done [#allocation5], 16
    $region37: #{tpu_custom_call.1} parent=1 // pred_fallthru
      _
    %228 = vsyncpa [#allocation4], 1
    %229 = vsyncpa [#allocation7], 1
    %230 = vsyncpa [#allocation5], 1

</llo_original>
